<compile_context>
chip_gen: v5e
topology: v5e:2x2
jax: 0.10.0
libtpu: 0.0.40
codegen_flags: <defaults>
</compile_context>

<pallas_src>
import functools

import jax
import jax.numpy as jnp
from jax.experimental import pallas as pl
from jax.experimental.pallas import tpu as pltpu


def _knn_sqdist_kernel(x_ref, emb_ref, out_ref):
    # x_ref:   (D, 1)   query (stored dtype), broadcast over lanes
    # emb_ref: (D, TN)  candidate embeddings tile (stored dtype)
    # out_ref: (1, TN)  squared L2 distance of each candidate to the query
    x = x_ref[...].astype(jnp.float32)
    e = emb_ref[...].astype(jnp.float32)
    diff = e - x                                   # VPU, full 128-lane use
    out_ref[...] = jnp.sum(diff * diff, axis=0, keepdims=True)  # sublane reduce (XLU)


def knn_sq_distances(x, embeddings, *, tn_target=1024):
    """||emb_i - x||_2^2 for every row i, computed with a pipelined Pallas kernel."""
    n, d = embeddings.shape
    assert x.shape == (1, d)

    # D-on-sublanes / N-on-lanes layout (wrapper-side transpose is layout plumbing).
    emb_t = embeddings.T                           # (D, N)
    x_t = x.T                                      # (D, 1)

    # Tile size: multiple of 128 lanes, capped so 2 buffers x tile stays tiny
    # relative to the v7x 32 MiB scoped-VMEM budget (D*TN*4 B per buffer).
    n_pad128 = ((n + 127) // 128) * 128
    tn = min(tn_target, n_pad128)
    n_pad = ((n + tn - 1) // tn) * tn
    if n_pad != n:
        emb_t = jnp.pad(emb_t, ((0, 0), (0, n_pad - n)))  # zero-padded cols sliced off below

    grid = (n_pad // tn,)
    itemsize = jnp.dtype(embeddings.dtype).itemsize
    cost = pl.CostEstimate(
        flops=3 * n_pad * d,                       # sub + mul + reduce
        transcendentals=0,
        bytes_accessed=n_pad * d * itemsize + d * itemsize + n_pad * 4,
    )

    dist_sq = pl.pallas_call(
        _knn_sqdist_kernel,
        out_shape=jax.ShapeDtypeStruct((1, n_pad), jnp.float32),
        grid=grid,
        in_specs=[
            pl.BlockSpec((d, 1), lambda i: (0, 0)),    # query, replicated per tile
            pl.BlockSpec((d, tn), lambda i: (0, i)),   # candidate tile
        ],
        out_specs=pl.BlockSpec((1, tn), lambda i: (0, i)),   # lane-dense output
        compiler_params=pltpu.CompilerParams(
            dimension_semantics=("parallel",),
            vmem_limit_bytes=32 * 1024 * 1024,
        ),
        cost_estimate=cost,
    )(x_t, emb_t)
    return dist_sq[0, :n]


@functools.partial(jax.jit, static_argnames=("k_neighbors", "direction"))
def knn_forward(x, embeddings, classes, k_neighbors=5, direction=1):
    """JAX equivalent of KNN.forward.

    direction=1  -> k smallest distances, sorted ascending (reference keeps k nearest).
    direction=-1 -> k largest distances, sorted descending (reference keeps k farthest).
    Returns (distances, neighbor_embeddings, neighbor_classes).
    """
    n = embeddings.shape[0]
    k = min(k_neighbors, n)
    dist_sq = knn_sq_distances(x, embeddings)

    if direction == -1:
        sel_sq, order = jax.lax.top_k(dist_sq, k)          # k largest, descending
    else:
        neg_sq, order = jax.lax.top_k(-dist_sq, k)         # k smallest, ascending
        sel_sq = -neg_sq

    dists = jnp.sqrt(jnp.maximum(sel_sq, 0.0))             # sqrt only on the k winners
    # TODO(synk): the reference carries arbitrary extra `*args` per neighbor (Python
    # objects); here we return the (embedding, class) pair plus the distance.
    return dists, embeddings[order], classes[order]


if __name__ == "__main__":
    key = jax.random.PRNGKey(0)
    kx, ke, kc = jax.random.split(key, 3)

    D = 32          # embedding dim
    N = 16          # number of stored (embedding, class) pairs
    K = 5           # k_neighbors

    x = jax.random.normal(kx, (1, D), dtype=jnp.float32)
    embeddings = jax.random.normal(ke, (N, D), dtype=jnp.float32)
    classes = jax.random.randint(kc, (N,), 0, 4, dtype=jnp.int32)

    # k nearest (direction=1)
    dists, nbr_emb, nbr_cls = knn_forward(
        x, embeddings, classes, k_neighbors=K, direction=1)
    jax.block_until_ready((dists, nbr_emb, nbr_cls))

    ref_dist = jnp.linalg.norm(embeddings - x, axis=1)
    ref_order = jnp.argsort(ref_dist)[:K]
    assert jnp.allclose(dists, ref_dist[ref_order], atol=1e-5), "distance mismatch"
    assert jnp.array_equal(nbr_cls, classes[ref_order]), "class mismatch"

    # k farthest (direction=-1)
    f_dists, _, f_cls = knn_forward(
        x, embeddings, classes, k_neighbors=K, direction=-1)
    jax.block_until_ready((f_dists, f_cls))
    ref_order_far = jnp.argsort(-ref_dist)[:K]
    assert jnp.allclose(f_dists, ref_dist[ref_order_far], atol=1e-5), "far distance mismatch"
    assert jnp.array_equal(f_cls, classes[ref_order_far]), "far class mismatch"

    print("KERNEL_OK")
</pallas_src>

<mosaic_0001>
module attributes {stable_mosaic.version = 11 : i64} {
  func.func @_knn_sqdist_kernel(%arg0: i32, %arg1: memref<32x1xf32, #tpu.memory_space<vmem>>, %arg2: memref<32x128xf32, #tpu.memory_space<vmem>>, %arg3: memref<1x128xf32, #tpu.memory_space<vmem>>) attributes {dimension_semantics = [#tpu.dimension_semantics<parallel>], iteration_bounds = array<i64: 1>, scalar_prefetch = 0 : i64, scratch_operands = 0 : i64, tpu.core_type = #tpu.core_type<tc>, window_params = [{pipeline_mode = #tpu.pipeline_mode<synchronous>, transform_indices = @transform_0, window_bounds = array<i64: 32, 1>}, {transform_indices = @transform_1, window_bounds = array<i64: 32, 128>}, {transform_indices = @transform_2, window_bounds = array<i64: 1, 128>}]} {
    %c0 = arith.constant 0 : index
    %c0_0 = arith.constant 0 : index
    %0 = vector.load %arg1[%c0, %c0_0] : memref<32x1xf32, #tpu.memory_space<vmem>>, vector<32x1xf32>
    %c0_1 = arith.constant 0 : index
    %c0_2 = arith.constant 0 : index
    %1 = vector.load %arg2[%c0_1, %c0_2] : memref<32x128xf32, #tpu.memory_space<vmem>>, vector<32x128xf32>
    %2 = vector.broadcast %0 : vector<32x1xf32> to vector<32x128xf32>
    %3 = arith.subf %1, %2 : vector<32x128xf32>
    %4 = arith.mulf %3, %3 : vector<32x128xf32>
    %cst = arith.constant dense<0.000000e+00> : vector<128xf32>
    %5 = vector.multi_reduction <add>, %4, %cst [0] : vector<32x128xf32> to vector<128xf32>
    %6 = vector.shape_cast %5 : vector<128xf32> to vector<1x128xf32>
    %c0_3 = arith.constant 0 : index
    %c0_4 = arith.constant 0 : index
    %7 = vector.load %arg3[%c0_3, %c0_4] : memref<1x128xf32, #tpu.memory_space<vmem>>, vector<1x128xf32>
    tpu.vector_store %arg3[%c0_3, %c0_4], %6 {strides = array<i32>} : memref<1x128xf32, #tpu.memory_space<vmem>>, vector<1x128xf32>,
    return
  }
  func.func @transform_0(%arg0: i32) -> (i32, i32) {
    %c0_i32 = arith.constant 0 : i32
    %c0_i32_0 = arith.constant 0 : i32
    %c0_i32_1 = arith.constant 0 : i32
    return %c0_i32, %c0_i32_0 : i32, i32
  }
  func.func @transform_1(%arg0: i32) -> (i32, i32) {
    %c0_i32 = arith.constant 0 : i32
    %c0_i32_0 = arith.constant 0 : i32
    return %c0_i32, %arg0 : i32, i32
  }
  func.func @transform_2(%arg0: i32) -> (i32, i32) {
    %c0_i32 = arith.constant 0 : i32
    %c0_i32_0 = arith.constant 0 : i32
    return %c0_i32, %arg0 : i32, i32
  }
}

</mosaic_0001>

<llo_original>
// kernel: knn_forward.1
$region0: #{knn_forward.1}
  #allocation0 [shape = 'u32[]', space=smem, size = 0x4, offset = 0x4, fixed_abs, tag = 'smem constant byte address 0x4 - core index']
  #allocation1 [shape = 'u32[72,128]{1,0:T(1,128)}', space=vmem, size = 0x9000, scoped, tag = 'internal scratch']
  %s0 = inlined_call_operand.vmem [shape: f32[32,1], index: 0, kind: input, shape index: {}]
  %s1 = inlined_call_operand.vmem [shape: f32[32,128], index: 1, kind: input, shape index: {}]
  %s2 = inlined_call_operand.vmem [shape: f32[1,128], index: 2, kind: output, shape index: {}]
  %s3 = sld [smem:[#allocation0]]
  $region18: #{knn_forward.1} parent=0
    _
  %s5 = ssub.s32 1, %s3
  %s6 = scalar_select 0, %s5, %s3
  // Predicated region
  $region2: #{knn_forward.1} parent=0 // pred_check
    _
  $region3: #{knn_forward.1} parent=0 // pred_check_branch
    %8 = sbr.rel (0) target = $region5
  $region4: #{knn_forward.1} parent=0 // pred_region
    _
  $region5: #{knn_forward.1} parent=0 // pred_fallthru
    _
  // Predicated region
  $region6: #{knn_forward.1} parent=0 // pred_check
    _
  $region7: #{knn_forward.1} parent=0 // pred_check_branch
    %10 = sbr.rel (0) target = $region9
  $region8: #{knn_forward.1} parent=0 // pred_region
    _
  $region9: #{knn_forward.1} parent=0 // pred_fallthru
    _
  %v11 = vld [vmem:[%s0] sm:$0xff]
  %v12 = vld [vmem:[%s0 + $0x8] sm:$0xff]
  %v13 = vld [vmem:[%s0 + $0x10] sm:$0xff]
  %v14 = vld [vmem:[%s0 + $0x18] sm:$0xff]
  %v15 = vld [vmem:[%s1] sm:$0xff]
  %v16 = vld [vmem:[%s1 + $0x8] sm:$0xff]
  %v17 = vld [vmem:[%s1 + $0x10] sm:$0xff]
  %v18 = vld [vmem:[%s1 + $0x18] sm:$0xff]
  %20 = vset.pattern.permute.xlu0 0
  %21 = vperm.xlu0 %20, %v11
  %v22 = vpop.permute.xlu0 %21
  %25 = vset.pattern.permute.xlu0 0
  %26 = vperm.xlu0 %25, %v12
  %v27 = vpop.permute.xlu0 %26
  %30 = vset.pattern.permute.xlu0 0
  %31 = vperm.xlu0 %30, %v13
  %v32 = vpop.permute.xlu0 %31
  %35 = vset.pattern.permute.xlu0 0
  %36 = vperm.xlu0 %35, %v14
  %v37 = vpop.permute.xlu0 %36
  %v39 = vsub.f32 %v15, %v22
  %v40 = vsub.f32 %v16, %v27
  %v41 = vsub.f32 %v17, %v32
  %v42 = vsub.f32 %v18, %v37
  %v43 = vmul.f32 %v39, %v39
  %v44 = vmul.f32 %v40, %v40
  %v45 = vmul.f32 %v41, %v41
  %v46 = vmul.f32 %v42, %v42
  %v47 = vadd.f32 %v43, %v44
  %v48 = vadd.f32 %v47, %v45
  %v49 = vadd.f32 %v48, %v46
  %v50 = vrot.slane %v49, 4
  %v51 = vadd.f32 %v49, %v50
  %v52 = vrot.slane %v51, 2
  %v53 = vadd.f32 %v51, %v52
  %v54 = vrot.slane %v53, 1
  %v55 = vadd.f32 %v53, %v54
  %56 = vst [vmem:[%s2] sm:$0x1] %v55
  // Predicated region
  $region10: #{knn_forward.1} parent=0 // pred_check
    _
  $region11: #{knn_forward.1} parent=0 // pred_check_branch
    %58 = sbr.rel (0) target = $region13
  $region12: #{knn_forward.1} parent=0 // pred_region
    _
  $region13: #{knn_forward.1} parent=0 // pred_fallthru
    _
  // Predicated region
  $region14: #{knn_forward.1} parent=0 // pred_check
    _
  $region15: #{knn_forward.1} parent=0 // pred_check_branch
    %60 = sbr.rel (0) target = $region17
  $region16: #{knn_forward.1} parent=0 // pred_region
    _
  $region17: #{knn_forward.1} parent=0 // pred_fallthru
    _

</llo_original>
